<compile_context>
chip_gen: v5e
topology: v5e:2x2
jax: 0.10.0
libtpu: 0.0.40
codegen_flags: <defaults>
</compile_context>

<pallas_src>
import jax
import jax.numpy as jnp
from jax.experimental import pallas as pl
from jax.experimental.pallas import tpu as pltpu

LANE = 128
NEG_INF = -1e30  # finite "minus infinity" for padded class columns


def _fused_gcn_kernel(adj_ref, x_ref, w1_ref, b1_ref, w2_ref, b2_ref, o_ref):
    # adj_ref: bf16 [N, N]   x_ref: bf16 [N, F]
    # w1_ref:  bf16 [F, H]   b1_ref: f32 [1, H]
    # w2_ref:  bf16 [H, Cp]  b2_ref: f32 [1, Cp]   o_ref: f32 [N, Cp]
    adj = adj_ref[...]

    # ---- layer 1: relu((adj @ x) @ w1 + b1)  (aggregate-then-transform) ----
    ax = jnp.dot(adj, x_ref[...],
                 preferred_element_type=jnp.float32)                 # [N, F] f32, K=N
    h = jnp.dot(ax.astype(adj.dtype), w1_ref[...],
                preferred_element_type=jnp.float32) + b1_ref[...]    # [N, H] f32
    h = jnp.maximum(h, 0.0)

    # F.dropout(p, training=False) == identity (inference mode)

    # ---- layer 2: (adj @ h) @ w2 + b2  (aggregate-then-transform) ----
    # The padded class width (8 -> 128) only touches the tiny [N,H]x[H,Cp]
    # matmul; the big adj contraction stays at width H.
    ah = jnp.dot(adj, h.astype(adj.dtype),
                 preferred_element_type=jnp.float32)                 # [N, H] f32, K=N
    y = jnp.dot(ah.astype(adj.dtype), w2_ref[...],
                preferred_element_type=jnp.float32) + b2_ref[...]    # [N, Cp] f32

    # ---- numerically-stable log_softmax over the class dim (f32 epilogue) ----
    # Padded class columns carry a -1e30 bias -> exp() == 0, so they do not
    # perturb the normalization over the real classes.
    m = jnp.max(y, axis=1, keepdims=True)
    lse = jnp.log(jnp.sum(jnp.exp(y - m), axis=1, keepdims=True)) + m
    o_ref[...] = y - lse


def _pad_cols(a, target_cols, fill=0.0):
    pad = target_cols - a.shape[1]
    if pad <= 0:
        return a
    return jnp.concatenate(
        [a, jnp.full((a.shape[0], pad), fill, a.dtype)], axis=1)


def prepare_gcn_constants(adj, params):
    """One-time layout prep (hoisted out of the per-call forward path):
    bf16 casts for the matmul operands + lane-dense padding of the class dim.

    Accuracy note: adj is cast to bf16 (quantizes D^-1/2 weights to ~3 sig
    digits) — keep adj f32 here if downstream accuracy is sensitive.
    """
    w1, b1, w2, b2 = params
    nclass = w2.shape[1]
    c_pad = ((nclass + LANE - 1) // LANE) * LANE  # lane-dense output width

    # Pad class dim: zero weight columns, -1e30 bias in padded columns.
    w2_p = _pad_cols(w2, c_pad, 0.0)
    b2_p = _pad_cols(b2, c_pad, NEG_INF)

    const = (
        adj.astype(jnp.bfloat16),
        w1.astype(jnp.bfloat16),
        b1.astype(jnp.float32),
        w2_p.astype(jnp.bfloat16),
        b2_p.astype(jnp.float32),
    )
    return jax.tree_util.tree_map(jax.block_until_ready, const), nclass


def gcn_net_forward(x_b, adj_b, w1_b, b1_f, w2_b, b2_f):
    """Forward pass of Net (eval mode). Inputs are already in kernel layout
    (bf16 matmul operands, padded class dim). Returns the lane-dense padded
    [N, 128] log-softmax slab; slice [:, :nclass] at the final consumer."""
    n = adj_b.shape[0]
    c_pad = w2_b.shape[1]

    vmem = pl.BlockSpec(memory_space=pltpu.MemorySpace.VMEM)
    return pl.pallas_call(
        _fused_gcn_kernel,
        out_shape=jax.ShapeDtypeStruct((n, c_pad), jnp.float32),
        in_specs=[vmem] * 6,
        out_specs=vmem,
    )(adj_b, x_b, w1_b, b1_f, w2_b, b2_f)


def make_normalized_adj(key, n):
    """Deterministic random symmetric graph, D^-1/2 (A + I) D^-1/2 (plain JAX glue)."""
    a = (jax.random.uniform(key, (n, n)) < 0.05).astype(jnp.float32)
    a = jnp.maximum(a, a.T)
    a = a + jnp.eye(n, dtype=jnp.float32)  # add self loops
    deg = jnp.sum(a, axis=1)
    d_inv_sqrt = 1.0 / jnp.sqrt(deg)
    return a * d_inv_sqrt[:, None] * d_inv_sqrt[None, :]


def init_params(key, nfeat, nhid, nclass):
    k1, k2 = jax.random.split(key)
    # Glorot-style deterministic init (matches GCNConv weight/bias shapes)
    w1 = jax.random.normal(k1, (nfeat, nhid), jnp.float32) * (1.0 / jnp.sqrt(nfeat))
    b1 = jnp.zeros((1, nhid), jnp.float32)
    w2 = jax.random.normal(k2, (nhid, nclass), jnp.float32) * (1.0 / jnp.sqrt(nhid))
    b2 = jnp.zeros((1, nclass), jnp.float32)
    return w1, b1, w2, b2


if __name__ == "__main__":
    N, NFEAT, NHID, NCLASS = 128, 16, 32, 8
    DROPOUT = 0.5  # unused at inference (training=False)

    key = jax.random.PRNGKey(0)
    kx, kadj, kp = jax.random.split(key, 3)

    x = jax.random.normal(kx, (N, NFEAT), jnp.float32)
    adj = make_normalized_adj(kadj, N)
    params = init_params(kp, NFEAT, NHID, NCLASS)

    # One-time prep (hoisted out of the per-call path).
    (adj_b, w1_b, b1_f, w2_b, b2_f), nclass = prepare_gcn_constants(adj, params)
    x_b = x.astype(jnp.bfloat16)  # activations in kernel layout

    fwd = jax.jit(gcn_net_forward)
    out_pad = fwd(x_b, adj_b, w1_b, b1_f, w2_b, b2_f)
    out_pad = jax.block_until_ready(out_pad)
    out = out_pad[:, :nclass]  # narrow slice once, at the consumer

    # Pure f32 JAX reference (kernel uses bf16 matmul operands -> looser tol).
    w1, b1, w2, b2 = params
    h_ref = jnp.maximum(adj @ (x @ w1) + b1, 0.0)
    y_ref = adj @ (h_ref @ w2) + b2
    ref = y_ref - jax.scipy.special.logsumexp(y_ref, axis=1, keepdims=True)

    assert out.shape == (N, NCLASS)
    assert jnp.allclose(out, ref, atol=3e-2, rtol=3e-2), \
        float(jnp.max(jnp.abs(out - ref)))

    print("KERNEL_OK")
</pallas_src>

<mosaic_0001>
module attributes {stable_mosaic.version = 11 : i64} {
  func.func @_fused_gcn_kernel(%arg0: memref<128x128xbf16, #tpu.memory_space<vmem>>, %arg1: memref<128x16xbf16, #tpu.memory_space<vmem>>, %arg2: memref<16x32xbf16, #tpu.memory_space<vmem>>, %arg3: memref<1x32xf32, #tpu.memory_space<vmem>>, %arg4: memref<32x128xbf16, #tpu.memory_space<vmem>>, %arg5: memref<1x128xf32, #tpu.memory_space<vmem>>, %arg6: memref<128x128xf32, #tpu.memory_space<vmem>>) attributes {dimension_semantics = [], scalar_prefetch = 0 : i64, scratch_operands = 0 : i64, tpu.core_type = #tpu.core_type<tc>} {
    %c0 = arith.constant 0 : index
    %c0_0 = arith.constant 0 : index
    %0 = vector.load %arg0[%c0, %c0_0] : memref<128x128xbf16, #tpu.memory_space<vmem>>, vector<128x128xbf16>
    %c0_1 = arith.constant 0 : index
    %c0_2 = arith.constant 0 : index
    %1 = vector.load %arg1[%c0_1, %c0_2] : memref<128x16xbf16, #tpu.memory_space<vmem>>, vector<128x16xbf16>
    %cst = arith.constant dense<0.000000e+00> : vector<128x16xf32>
    %2 = tpu.matmul %0, %1, %cst {dimension_numbers = #tpu.dot_dimension_numbers<[1], [0], [0], [1], [0, 0, 1, 1], [], []>} : vector<128x128xbf16>, vector<128x16xbf16>, vector<128x16xf32> -> vector<128x16xf32>
    %3 = arith.truncf %2 : vector<128x16xf32> to vector<128x16xbf16>
    %c0_3 = arith.constant 0 : index
    %c0_4 = arith.constant 0 : index
    %4 = vector.load %arg2[%c0_3, %c0_4] : memref<16x32xbf16, #tpu.memory_space<vmem>>, vector<16x32xbf16>
    %cst_5 = arith.constant dense<0.000000e+00> : vector<128x32xf32>
    %5 = tpu.matmul %3, %4, %cst_5 {dimension_numbers = #tpu.dot_dimension_numbers<[1], [0], [0], [1], [0, 0, 1, 1], [], []>} : vector<128x16xbf16>, vector<16x32xbf16>, vector<128x32xf32> -> vector<128x32xf32>
    %c0_6 = arith.constant 0 : index
    %c0_7 = arith.constant 0 : index
    %6 = vector.load %arg3[%c0_6, %c0_7] : memref<1x32xf32, #tpu.memory_space<vmem>>, vector<1x32xf32>
    %7 = vector.broadcast %6 : vector<1x32xf32> to vector<128x32xf32>
    %8 = arith.addf %5, %7 : vector<128x32xf32>
    %cst_8 = arith.constant 0.000000e+00 : f32
    %9 = vector.broadcast %cst_8 : f32 to vector<128x32xf32>
    %10 = arith.maximumf %8, %9 : vector<128x32xf32>
    %11 = arith.truncf %10 : vector<128x32xf32> to vector<128x32xbf16>
    %cst_9 = arith.constant dense<0.000000e+00> : vector<128x32xf32>
    %12 = tpu.matmul %0, %11, %cst_9 {dimension_numbers = #tpu.dot_dimension_numbers<[1], [0], [0], [1], [0, 0, 1, 1], [], []>} : vector<128x128xbf16>, vector<128x32xbf16>, vector<128x32xf32> -> vector<128x32xf32>
    %13 = arith.truncf %12 : vector<128x32xf32> to vector<128x32xbf16>
    %c0_10 = arith.constant 0 : index
    %c0_11 = arith.constant 0 : index
    %14 = vector.load %arg4[%c0_10, %c0_11] : memref<32x128xbf16, #tpu.memory_space<vmem>>, vector<32x128xbf16>
    %cst_12 = arith.constant dense<0.000000e+00> : vector<128x128xf32>
    %15 = tpu.matmul %13, %14, %cst_12 {dimension_numbers = #tpu.dot_dimension_numbers<[1], [0], [0], [1], [0, 0, 1, 1], [], []>} : vector<128x32xbf16>, vector<32x128xbf16>, vector<128x128xf32> -> vector<128x128xf32>
    %c0_13 = arith.constant 0 : index
    %c0_14 = arith.constant 0 : index
    %16 = vector.load %arg5[%c0_13, %c0_14] : memref<1x128xf32, #tpu.memory_space<vmem>>, vector<1x128xf32>
    %17 = vector.broadcast %16 : vector<1x128xf32> to vector<128x128xf32>
    %18 = arith.addf %15, %17 : vector<128x128xf32>
    %cst_15 = arith.constant dense<0xFF800000> : vector<128xf32>
    %19 = vector.multi_reduction <maximumf>, %18, %cst_15 [1] : vector<128x128xf32> to vector<128xf32>
    %20 = vector.shape_cast %19 : vector<128xf32> to vector<128x1xf32>
    %21 = vector.broadcast %20 : vector<128x1xf32> to vector<128x128xf32>
    %22 = arith.subf %18, %21 : vector<128x128xf32>
    %23 = math.exp %22 : vector<128x128xf32>
    %cst_16 = arith.constant dense<0.000000e+00> : vector<128xf32>
    %24 = vector.multi_reduction <add>, %23, %cst_16 [1] : vector<128x128xf32> to vector<128xf32>
    %25 = vector.shape_cast %24 : vector<128xf32> to vector<128x1xf32>
    %26 = math.log %25 : vector<128x1xf32>
    %27 = arith.addf %26, %20 : vector<128x1xf32>
    %28 = vector.broadcast %27 : vector<128x1xf32> to vector<128x128xf32>
    %29 = arith.subf %18, %28 : vector<128x128xf32>
    %c0_17 = arith.constant 0 : index
    %c0_18 = arith.constant 0 : index
    %30 = vector.load %arg6[%c0_17, %c0_18] : memref<128x128xf32, #tpu.memory_space<vmem>>, vector<128x128xf32>
    tpu.vector_store %arg6[%c0_17, %c0_18], %29 {strides = array<i32>} : memref<128x128xf32, #tpu.memory_space<vmem>>, vector<128x128xf32>,
    return
  }
}

</mosaic_0001>

<llo_original>
// kernel: gcn_net_forward.1
$region0: #{gcn_net_forward.1}
  #allocation0 [shape = 'u32[]', space=smem, size = 0x4, offset = 0x4, fixed_abs, tag = 'smem constant byte address 0x4 - core index']
  #allocation1 [shape = 'u32[72,128]{1,0:T(1,128)}', space=vmem, size = 0x9000, scoped, tag = 'internal scratch']
  %s0 = inlined_call_operand.vmem [shape: bf16[128,128], index: 0, kind: input, shape index: {}]
  %s1 = inlined_call_operand.vmem [shape: bf16[128,16], index: 1, kind: input, shape index: {}]
  %s2 = inlined_call_operand.vmem [shape: bf16[16,32], index: 2, kind: input, shape index: {}]
  %s3 = inlined_call_operand.vmem [shape: f32[1,32], index: 3, kind: input, shape index: {}]
  %s4 = inlined_call_operand.hbm [shape: bf16[32,128], index: 4, kind: input, shape index: {}]
  %s5 = inlined_call_operand.vmem [shape: f32[1,128], index: 5, kind: input, shape index: {}]
  %s6 = inlined_call_operand.hbm [shape: f32[128,128], index: 6, kind: output, shape index: {}]
  %s7 = sld [smem:[#allocation0]]
  $region38: #{gcn_net_forward.1} parent=0
    _
  %s9 = ssub.s32 1, %s7
  %s10 = scalar_select 0, %s9, %s7
  $region1: #{gcn_net_forward.1} parent=0
    #allocation2 [shape = 'u8[8192]{0}', space=vmem, size = 0x2000, scoped, tag = 'input window, operand 4, single buffered']
    #allocation3 [shape = 's32[1]{0}', space=sflag, size = 0x4, scoped, tag = 'scoped memory for gcn_net_forward.1']
    #allocation4 [shape = 's32[1]{0}', space=sflag, size = 0x4, scoped, tag = 'scoped memory for gcn_net_forward.1']
    #allocation5 [shape = 'u8[65536]{0}', space=vmem, size = 0x10000, scoped, tag = 'output window, operand 0, single buffered']
    %11 = vsyncpa [#allocation3], 0
    %12 = vsyncpa [#allocation4], 0
    // Predicated region
    $region2: #{gcn_net_forward.1} parent=1 // pred_check
      _
    $region3: #{gcn_net_forward.1} parent=1 // pred_check_branch
      %14 = sbr.rel (0) target = $region5
    $region4: #{gcn_net_forward.1} parent=1 // pred_region
      _
    $region5: #{gcn_net_forward.1} parent=1 // pred_fallthru
      _
    // Predicated region
    $region6: #{gcn_net_forward.1} parent=1 // pred_check
      _
    $region7: #{gcn_net_forward.1} parent=1 // pred_check_branch
      %16 = sbr.rel (0) target = $region9
    $region8: #{gcn_net_forward.1} parent=1 // pred_region
      _
    $region9: #{gcn_net_forward.1} parent=1 // pred_fallthru
      _
    // Predicated region
    $region10: #{gcn_net_forward.1} parent=1 // pred_check
      _
    $region11: #{gcn_net_forward.1} parent=1 // pred_check_branch
      %18 = sbr.rel (0) target = $region13
    $region12: #{gcn_net_forward.1} parent=1 // pred_region
      _
    $region13: #{gcn_net_forward.1} parent=1 // pred_fallthru
      _
    // Predicated region
    $region14: #{gcn_net_forward.1} parent=1 // pred_check
      _
    $region15: #{gcn_net_forward.1} parent=1 // pred_check_branch
      %20 = sbr.rel (0) target = $region17
    $region16: #{gcn_net_forward.1} parent=1 // pred_region
      _
    $region17: #{gcn_net_forward.1} parent=1 // pred_fallthru
      _
    // Predicated region
    $region18: #{gcn_net_forward.1} parent=1 // pred_check
      _
    $region19: #{gcn_net_forward.1} parent=1 // pred_check_branch
      %22 = sbr.rel (0) target = $region21
    $region20: #{gcn_net_forward.1} parent=1 // pred_region
      %24 = vsyncadd [#allocation3], 0
      %s25 = sshll.u32 %s4, 4
      %s26 = int_to_ptr.hbm [resolvable:$true] %s25
      %s27 = sshll.u32 [#allocation2], 4
      %s28 = int_to_ptr.vmem [resolvable:$true] %s27
      %33 = dma.hbm_to_vmem [thread:$0]  %s26, 256, %s28, [#allocation3], 64, 64, 4
    $region21: #{gcn_net_forward.1} parent=1 // pred_fallthru
      _
    // Predicated region
    $region22: #{gcn_net_forward.1} parent=1 // pred_check
      _
    $region23: #{gcn_net_forward.1} parent=1 // pred_check_branch
      %35 = sbr.rel (0) target = $region25
    $region24: #{gcn_net_forward.1} parent=1 // pred_region
      _
    $region25: #{gcn_net_forward.1} parent=1 // pred_fallthru
      _
    // Predicated region
    $region26: #{gcn_net_forward.1} parent=1 // pred_check
      _
    $region27: #{gcn_net_forward.1} parent=1 // pred_check_branch
      %37 = sbr.rel (0) target = $region29
    $region28: #{gcn_net_forward.1} parent=1 // pred_region
      %39 = dma.done [#allocation3], 256
    $region29: #{gcn_net_forward.1} parent=1 // pred_fallthru
      _
    %v41 = vld [vmem:[%s0] sm:$0xf]
    %v42 = vld [vmem:[%s0 + $0x4] sm:$0xf]
    %v43 = vld [vmem:[%s0 + $0x8] sm:$0xf]
    %v44 = vld [vmem:[%s0 + $0xc] sm:$0xf]
    %v45 = vld [vmem:[%s0 + $0x10] sm:$0xf]
    %v46 = vld [vmem:[%s0 + $0x14] sm:$0xf]
    %v47 = vld [vmem:[%s0 + $0x18] sm:$0xf]
    %v48 = vld [vmem:[%s0 + $0x1c] sm:$0xf]
    %v49 = vld [vmem:[%s0 + $0x20] sm:$0xf]
    %v50 = vld [vmem:[%s0 + $0x24] sm:$0xf]
    %v51 = vld [vmem:[%s0 + $0x28] sm:$0xf]
    %v52 = vld [vmem:[%s0 + $0x2c] sm:$0xf]
    %v53 = vld [vmem:[%s0 + $0x30] sm:$0xf]
    %v54 = vld [vmem:[%s0 + $0x34] sm:$0xf]
    %v55 = vld [vmem:[%s0 + $0x38] sm:$0xf]
    %v56 = vld [vmem:[%s0 + $0x3c] sm:$0xf]
    %v57 = vld [vmem:[%s1] sm:$0xf]
    %v58 = vld [vmem:[%s1 + $0x4] sm:$0xf]
    %v59 = vld [vmem:[%s1 + $0x8] sm:$0xf]
    %v60 = vld [vmem:[%s1 + $0xc] sm:$0xf]
    %v61 = vld [vmem:[%s1 + $0x10] sm:$0xf]
    %v62 = vld [vmem:[%s1 + $0x14] sm:$0xf]
    %v63 = vld [vmem:[%s1 + $0x18] sm:$0xf]
    %v64 = vld [vmem:[%s1 + $0x1c] sm:$0xf]
    %v65 = vld [vmem:[%s1 + $0x20] sm:$0xf]
    %v66 = vld [vmem:[%s1 + $0x24] sm:$0xf]
    %v67 = vld [vmem:[%s1 + $0x28] sm:$0xf]
    %v68 = vld [vmem:[%s1 + $0x2c] sm:$0xf]
    %v69 = vld [vmem:[%s1 + $0x30] sm:$0xf]
    %v70 = vld [vmem:[%s1 + $0x34] sm:$0xf]
    %v71 = vld [vmem:[%s1 + $0x38] sm:$0xf]
    %v72 = vld [vmem:[%s1 + $0x3c] sm:$0xf]
    %v89 = vunpack.c.l.b16 %v41
    %v90 = vunpack.c.l.b16 %v42
    %v91 = vunpack.c.l.b16 %v43
    %v92 = vunpack.c.l.b16 %v44
    %v93 = vunpack.c.l.b16 %v45
    %v94 = vunpack.c.l.b16 %v46
    %v95 = vunpack.c.l.b16 %v47
    %v96 = vunpack.c.l.b16 %v48
    %v97 = vunpack.c.l.b16 %v49
    %v98 = vunpack.c.l.b16 %v50
    %v99 = vunpack.c.l.b16 %v51
    %v100 = vunpack.c.l.b16 %v52
    %v101 = vunpack.c.l.b16 %v53
    %v102 = vunpack.c.l.b16 %v54
    %v103 = vunpack.c.l.b16 %v55
    %v104 = vunpack.c.l.b16 %v56
    %v105 = vpack.c.b16 %v90, %v89
    %v106 = vpack.c.b16 %v92, %v91
    %v107 = vpack.c.b16 %v94, %v93
    %v108 = vpack.c.b16 %v96, %v95
    %v109 = vpack.c.b16 %v98, %v97
    %v110 = vpack.c.b16 %v100, %v99
    %v111 = vpack.c.b16 %v102, %v101
    %v112 = vpack.c.b16 %v104, %v103
    %v137 = vunpack.c.l.b16 %v57
    %v138 = vunpack.c.l.b16 %v58
    %v139 = vunpack.c.l.b16 %v59
    %v140 = vunpack.c.l.b16 %v60
    %v141 = vunpack.c.l.b16 %v61
    %v142 = vunpack.c.l.b16 %v62
    %v143 = vunpack.c.l.b16 %v63
    %v144 = vunpack.c.l.b16 %v64
    %v145 = vunpack.c.l.b16 %v65
    %v146 = vunpack.c.l.b16 %v66
    %v147 = vunpack.c.l.b16 %v67
    %v148 = vunpack.c.l.b16 %v68
    %v149 = vunpack.c.l.b16 %v69
    %v150 = vunpack.c.l.b16 %v70
    %v151 = vunpack.c.l.b16 %v71
    %v152 = vunpack.c.l.b16 %v72
    %v153 = vpack.c.b16 %v138, %v137
    %v154 = vpack.c.b16 %v140, %v139
    %v155 = vpack.c.b16 %v142, %v141
    %v156 = vpack.c.b16 %v144, %v143
    %v157 = vpack.c.b16 %v146, %v145
    %v158 = vpack.c.b16 %v148, %v147
    %v159 = vpack.c.b16 %v150, %v149
    %v160 = vpack.c.b16 %v152, %v151
    %169 = vmatpush.bf16.msra.mxu0 %v160
    %170 = vmatpush.bf16.msra.mxu0 %v159
    %171 = vmatpush.bf16.msra.mxu0 %v158
    %172 = vmatpush.bf16.msra.mxu0 %v157
    %173 = vmatpush.bf16.msra.mxu0 %v156
    %174 = vmatpush.bf16.msra.mxu0 %v155
    %175 = vmatpush.bf16.msra.mxu0 %v154
    %176 = vmatpush.bf16.msra.mxu0 %v153
    %177 = vmatmul.bf16.gmra.mxu0 %v105
    %v178 = vpop.f32.mrf.mxu0
    %v179 = vadd.f32 0.0, %v178
    %v180 = vpop.f32.mrf.mxu0
    %v181 = vadd.f32 0.0, %v180
    %182 = vmatmul.bf16.gmra.mxu0 %v106
    %v183 = vpop.f32.mrf.mxu0
    %v184 = vadd.f32 0.0, %v183
    %v185 = vpop.f32.mrf.mxu0
    %v186 = vadd.f32 0.0, %v185
    %187 = vmatmul.bf16.gmra.mxu0 %v107
    %v188 = vpop.f32.mrf.mxu0
    %v189 = vadd.f32 0.0, %v188
    %v190 = vpop.f32.mrf.mxu0
    %v191 = vadd.f32 0.0, %v190
    %192 = vmatmul.bf16.gmra.mxu0 %v108
    %v193 = vpop.f32.mrf.mxu0
    %v194 = vadd.f32 0.0, %v193
    %v195 = vpop.f32.mrf.mxu0
    %v196 = vadd.f32 0.0, %v195
    %197 = vmatmul.bf16.gmra.mxu0 %v109
    %v198 = vpop.f32.mrf.mxu0
    %v199 = vadd.f32 0.0, %v198
    %v200 = vpop.f32.mrf.mxu0
    %v201 = vadd.f32 0.0, %v200
    %202 = vmatmul.bf16.gmra.mxu0 %v110
    %v203 = vpop.f32.mrf.mxu0
    %v204 = vadd.f32 0.0, %v203
    %v205 = vpop.f32.mrf.mxu0
    %v206 = vadd.f32 0.0, %v205
    %207 = vmatmul.bf16.gmra.mxu0 %v111
    %v208 = vpop.f32.mrf.mxu0
    %v209 = vadd.f32 0.0, %v208
    %v210 = vpop.f32.mrf.mxu0
    %v211 = vadd.f32 0.0, %v210
    %212 = vmatmul.bf16.gmra.mxu0 %v112
    %v213 = vpop.f32.mrf.mxu0
    %v214 = vadd.f32 0.0, %v213
    %v215 = vpop.f32.mrf.mxu0
    %v216 = vadd.f32 0.0, %v215
    %217 = vdwg.mxu0
    %v218 = vpack.c.bf16 %v181, %v179
    %v219 = vpack.c.bf16 %v186, %v184
    %v220 = vpack.c.bf16 %v191, %v189
    %v221 = vpack.c.bf16 %v196, %v194
    %v222 = vpack.c.bf16 %v201, %v199
    %v223 = vpack.c.bf16 %v206, %v204
    %v224 = vpack.c.bf16 %v211, %v209
    %v225 = vpack.c.bf16 %v216, %v214
    %v226 = vld [vmem:[%s2] sm:$0xf]
    %v227 = vld [vmem:[%s2 + $0x4] sm:$0xf]
    %v228 = vld [vmem:[%s3] sm:$0x1]
    %v230 = vperm.slane %v228, 0
    %v234 = vunpack.c.l.b16 %v226
    %v235 = vunpack.c.l.b16 %v227
    %v236 = vpack.c.b16 %v235, %v234
    %vm238 = vcmask 130048
    %v240 = vsel %vm238, %v218, 0
    %v243 = vsel %vm238, %v219, 0
    %v246 = vsel %vm238, %v220, 0
    %v249 = vsel %vm238, %v221, 0
    %v252 = vsel %vm238, %v222, 0
    %v255 = vsel %vm238, %v223, 0
    %v258 = vsel %vm238, %v224, 0
    %v261 = vsel %vm238, %v225, 0
    %263 = vmatpush.bf16.msra.mxu0 0
    %264 = vmatpush.bf16.msra.mxu0 0
    %265 = vmatpush.bf16.msra.mxu0 0
    %266 = vmatpush.bf16.msra.mxu0 0
    %267 = vmatpush.bf16.msra.mxu0 0
    %268 = vmatpush.bf16.msra.mxu0 0
    %269 = vmatpush.bf16.msra.mxu0 0
    %270 = vmatpush.bf16.msra.mxu0 %v236
    %271 = vmatmul.bf16.gmra.mxu0 %v240
    %v272 = vpop.f32.mrf.mxu0
    %v273 = vadd.f32 %v230, %v272
    %v274 = vpop.f32.mrf.mxu0
    %v275 = vadd.f32 %v230, %v274
    %276 = vmatmul.bf16.gmra.mxu0 %v243
    %v277 = vpop.f32.mrf.mxu0
    %v278 = vadd.f32 %v230, %v277
    %v279 = vpop.f32.mrf.mxu0
    %v280 = vadd.f32 %v230, %v279
    %281 = vmatmul.bf16.gmra.mxu0 %v246
    %v282 = vpop.f32.mrf.mxu0
    %v283 = vadd.f32 %v230, %v282
    %v284 = vpop.f32.mrf.mxu0
    %v285 = vadd.f32 %v230, %v284
    %286 = vmatmul.bf16.gmra.mxu0 %v249
    %v287 = vpop.f32.mrf.mxu0
    %v288 = vadd.f32 %v230, %v287
    %v289 = vpop.f32.mrf.mxu0
    %v290 = vadd.f32 %v230, %v289
    %291 = vmatmul.bf16.gmra.mxu0 %v252
    %v292 = vpop.f32.mrf.mxu0
    %v293 = vadd.f32 %v230, %v292
    %v294 = vpop.f32.mrf.mxu0
    %v295 = vadd.f32 %v230, %v294
    %296 = vmatmul.bf16.gmra.mxu0 %v255
    %v297 = vpop.f32.mrf.mxu0
    %v298 = vadd.f32 %v230, %v297
    %v299 = vpop.f32.mrf.mxu0
    %v300 = vadd.f32 %v230, %v299
    %301 = vmatmul.bf16.gmra.mxu0 %v258
    %v302 = vpop.f32.mrf.mxu0
    %v303 = vadd.f32 %v230, %v302
    %v304 = vpop.f32.mrf.mxu0
    %v305 = vadd.f32 %v230, %v304
    %306 = vmatmul.bf16.gmra.mxu0 %v261
    %v307 = vpop.f32.mrf.mxu0
    %v308 = vadd.f32 %v230, %v307
    %v309 = vpop.f32.mrf.mxu0
    %v310 = vadd.f32 %v230, %v309
    %311 = vdwg.mxu0
    %v312 = vmax.f32 %v273, 0.0
    %v313 = vmax.f32 %v275, 0.0
    %v314 = vmax.f32 %v278, 0.0
    %v315 = vmax.f32 %v280, 0.0
    %v316 = vmax.f32 %v283, 0.0
    %v317 = vmax.f32 %v285, 0.0
    %v318 = vmax.f32 %v288, 0.0
    %v319 = vmax.f32 %v290, 0.0
    %v320 = vmax.f32 %v293, 0.0
    %v321 = vmax.f32 %v295, 0.0
    %v322 = vmax.f32 %v298, 0.0
    %v323 = vmax.f32 %v300, 0.0
    %v324 = vmax.f32 %v303, 0.0
    %v325 = vmax.f32 %v305, 0.0
    %v326 = vmax.f32 %v308, 0.0
    %v327 = vmax.f32 %v310, 0.0
    %v328 = vpack.c.bf16 %v313, %v312
    %v329 = vpack.c.bf16 %v315, %v314
    %v330 = vpack.c.bf16 %v317, %v316
    %v331 = vpack.c.bf16 %v319, %v318
    %v332 = vpack.c.bf16 %v321, %v320
    %v333 = vpack.c.bf16 %v323, %v322
    %v334 = vpack.c.bf16 %v325, %v324
    %v335 = vpack.c.bf16 %v327, %v326
    %336 = vmatpush.bf16.msra.mxu0 %v335
    %337 = vmatpush.bf16.msra.mxu0 %v334
    %338 = vmatpush.bf16.msra.mxu0 %v333
    %339 = vmatpush.bf16.msra.mxu0 %v332
    %340 = vmatpush.bf16.msra.mxu0 %v331
    %341 = vmatpush.bf16.msra.mxu0 %v330
    %342 = vmatpush.bf16.msra.mxu0 %v329
    %343 = vmatpush.bf16.msra.mxu0 %v328
    %344 = vmatmul.bf16.gmra.mxu0 %v105
    %v345 = vpop.f32.mrf.mxu0
    %v346 = vadd.f32 0.0, %v345
    %v347 = vpop.f32.mrf.mxu0
    %v348 = vadd.f32 0.0, %v347
    %349 = vmatmul.bf16.gmra.mxu0 %v106
    %v350 = vpop.f32.mrf.mxu0
    %v351 = vadd.f32 0.0, %v350
    %v352 = vpop.f32.mrf.mxu0
    %v353 = vadd.f32 0.0, %v352
    %354 = vmatmul.bf16.gmra.mxu0 %v107
    %v355 = vpop.f32.mrf.mxu0
    %v356 = vadd.f32 0.0, %v355
    %v357 = vpop.f32.mrf.mxu0
    %v358 = vadd.f32 0.0, %v357
    %359 = vmatmul.bf16.gmra.mxu0 %v108
    %v360 = vpop.f32.mrf.mxu0
    %v361 = vadd.f32 0.0, %v360
    %v362 = vpop.f32.mrf.mxu0
    %v363 = vadd.f32 0.0, %v362
    %364 = vmatmul.bf16.gmra.mxu0 %v109
    %v365 = vpop.f32.mrf.mxu0
    %v366 = vadd.f32 0.0, %v365
    %v367 = vpop.f32.mrf.mxu0
    %v368 = vadd.f32 0.0, %v367
    %369 = vmatmul.bf16.gmra.mxu0 %v110
    %v370 = vpop.f32.mrf.mxu0
    %v371 = vadd.f32 0.0, %v370
    %v372 = vpop.f32.mrf.mxu0
    %v373 = vadd.f32 0.0, %v372
    %374 = vmatmul.bf16.gmra.mxu0 %v111
    %v375 = vpop.f32.mrf.mxu0
    %v376 = vadd.f32 0.0, %v375
    %v377 = vpop.f32.mrf.mxu0
    %v378 = vadd.f32 0.0, %v377
    %379 = vmatmul.bf16.gmra.mxu0 %v112
    %v380 = vpop.f32.mrf.mxu0
    %v381 = vadd.f32 0.0, %v380
    %v382 = vpop.f32.mrf.mxu0
    %v383 = vadd.f32 0.0, %v382
    %384 = vdwg.mxu0
    %v385 = vpack.c.bf16 %v348, %v346
    %v386 = vpack.c.bf16 %v353, %v351
    %v387 = vpack.c.bf16 %v358, %v356
    %v388 = vpack.c.bf16 %v363, %v361
    %v389 = vpack.c.bf16 %v368, %v366
    %v390 = vpack.c.bf16 %v373, %v371
    %v391 = vpack.c.bf16 %v378, %v376
    %v392 = vpack.c.bf16 %v383, %v381
    %v393 = vld [vmem:[#allocation2] sm:$0xf]
    %v394 = vld [vmem:[#allocation2 + $0x4] sm:$0xf]
    %v395 = vld [vmem:[#allocation2 + $0x8] sm:$0xf]
    %v396 = vld [vmem:[#allocation2 + $0xc] sm:$0xf]
    %v397 = vld [vmem:[%s5] sm:$0x1]
    %v399 = vperm.slane %v397, 0
    %v405 = vunpack.c.l.b16 %v393
    %v406 = vunpack.c.l.b16 %v394
    %v407 = vunpack.c.l.b16 %v395
    %v408 = vunpack.c.l.b16 %v396
    %v409 = vpack.c.b16 %v406, %v405
    %v410 = vpack.c.b16 %v408, %v407
    %vm413 = vcmask 261120
    %v415 = vsel %vm413, %v385, 0
    %v418 = vsel %vm413, %v386, 0
    %v421 = vsel %vm413, %v387, 0
    %v424 = vsel %vm413, %v388, 0
    %v427 = vsel %vm413, %v389, 0
    %v430 = vsel %vm413, %v390, 0
    %v433 = vsel %vm413, %v391, 0
    %v436 = vsel %vm413, %v392, 0
    %438 = vmatpush.bf16.msra.mxu0 0
    %439 = vmatpush.bf16.msra.mxu0 0
    %440 = vmatpush.bf16.msra.mxu0 0
    %441 = vmatpush.bf16.msra.mxu0 0
    %442 = vmatpush.bf16.msra.mxu0 0
    %443 = vmatpush.bf16.msra.mxu0 0
    %444 = vmatpush.bf16.msra.mxu0 %v410
    %445 = vmatpush.bf16.msra.mxu0 %v409
    %446 = vmatmul.bf16.gmra.mxu0 %v415
    %v447 = vpop.f32.mrf.mxu0
    %v448 = vadd.f32 %v399, %v447
    %v449 = vpop.f32.mrf.mxu0
    %v450 = vadd.f32 %v399, %v449
    %451 = vmatmul.bf16.gmra.mxu0 %v418
    %v452 = vpop.f32.mrf.mxu0
    %v453 = vadd.f32 %v399, %v452
    %v454 = vpop.f32.mrf.mxu0
    %v455 = vadd.f32 %v399, %v454
    %456 = vmatmul.bf16.gmra.mxu0 %v421
    %v457 = vpop.f32.mrf.mxu0
    %v458 = vadd.f32 %v399, %v457
    %v459 = vpop.f32.mrf.mxu0
    %v460 = vadd.f32 %v399, %v459
    %461 = vmatmul.bf16.gmra.mxu0 %v424
    %v462 = vpop.f32.mrf.mxu0
    %v463 = vadd.f32 %v399, %v462
    %v464 = vpop.f32.mrf.mxu0
    %v465 = vadd.f32 %v399, %v464
    %466 = vmatmul.bf16.gmra.mxu0 %v427
    %v467 = vpop.f32.mrf.mxu0
    %v468 = vadd.f32 %v399, %v467
    %v469 = vpop.f32.mrf.mxu0
    %v470 = vadd.f32 %v399, %v469
    %471 = vmatmul.bf16.gmra.mxu0 %v430
    %v472 = vpop.f32.mrf.mxu0
    %v473 = vadd.f32 %v399, %v472
    %v474 = vpop.f32.mrf.mxu0
    %v475 = vadd.f32 %v399, %v474
    %476 = vmatmul.bf16.gmra.mxu0 %v433
    %v477 = vpop.f32.mrf.mxu0
    %v478 = vadd.f32 %v399, %v477
    %v479 = vpop.f32.mrf.mxu0
    %v480 = vadd.f32 %v399, %v479
    %481 = vmatmul.bf16.gmra.mxu0 %v436
    %v482 = vpop.f32.mrf.mxu0
    %v483 = vadd.f32 %v399, %v482
    %v484 = vpop.f32.mrf.mxu0
    %v485 = vadd.f32 %v399, %v484
    %486 = vdwg.mxu0
    %487 = vmax.xlane.f32.xlu0 %v448
    %v488 = vpop.xlane.xlu0 %487
    %489 = vmax.xlane.f32.xlu0 %v450
    %v490 = vpop.xlane.xlu0 %489
    %491 = vmax.xlane.f32.xlu0 %v453
    %v492 = vpop.xlane.xlu0 %491
    %493 = vmax.xlane.f32.xlu0 %v455
    %v494 = vpop.xlane.xlu0 %493
    %495 = vmax.xlane.f32.xlu0 %v458
    %v496 = vpop.xlane.xlu0 %495
    %497 = vmax.xlane.f32.xlu0 %v460
    %v498 = vpop.xlane.xlu0 %497
    %499 = vmax.xlane.f32.xlu0 %v463
    %v500 = vpop.xlane.xlu0 %499
    %501 = vmax.xlane.f32.xlu0 %v465
    %v502 = vpop.xlane.xlu0 %501
    %503 = vmax.xlane.f32.xlu0 %v468
    %v504 = vpop.xlane.xlu0 %503
    %505 = vmax.xlane.f32.xlu0 %v470
    %v506 = vpop.xlane.xlu0 %505
    %507 = vmax.xlane.f32.xlu0 %v473
    %v508 = vpop.xlane.xlu0 %507
    %509 = vmax.xlane.f32.xlu0 %v475
    %v510 = vpop.xlane.xlu0 %509
    %511 = vmax.xlane.f32.xlu0 %v478
    %v512 = vpop.xlane.xlu0 %511
    %513 = vmax.xlane.f32.xlu0 %v480
    %v514 = vpop.xlane.xlu0 %513
    %515 = vmax.xlane.f32.xlu0 %v483
    %v516 = vpop.xlane.xlu0 %515
    %517 = vmax.xlane.f32.xlu0 %v485
    %v518 = vpop.xlane.xlu0 %517
    %v519 = vsub.f32 %v448, %v488
    %v520 = vsub.f32 %v450, %v490
    %v521 = vsub.f32 %v453, %v492
    %v522 = vsub.f32 %v455, %v494
    %v523 = vsub.f32 %v458, %v496
    %v524 = vsub.f32 %v460, %v498
    %v525 = vsub.f32 %v463, %v500
    %v526 = vsub.f32 %v465, %v502
    %v527 = vsub.f32 %v468, %v504
    %v528 = vsub.f32 %v470, %v506
    %v529 = vsub.f32 %v473, %v508
    %v530 = vsub.f32 %v475, %v510
    %v531 = vsub.f32 %v478, %v512
    %v532 = vsub.f32 %v480, %v514
    %v533 = vsub.f32 %v483, %v516
    %v534 = vsub.f32 %v485, %v518
    %v535 = vmul.f32 %v519, 1.442695
    %v536 = vpow.pop %v535
    %v537 = vmul.f32 %v520, 1.442695
    %v538 = vpow.pop %v537
    %v539 = vmul.f32 %v521, 1.442695
    %v540 = vpow.pop %v539
    %v541 = vmul.f32 %v522, 1.442695
    %v542 = vpow.pop %v541
    %v543 = vmul.f32 %v523, 1.442695
    %v544 = vpow.pop %v543
    %v545 = vmul.f32 %v524, 1.442695
    %v546 = vpow.pop %v545
    %v547 = vmul.f32 %v525, 1.442695
    %v548 = vpow.pop %v547
    %v549 = vmul.f32 %v526, 1.442695
    %v550 = vpow.pop %v549
    %v551 = vmul.f32 %v527, 1.442695
    %v552 = vpow.pop %v551
    %v553 = vmul.f32 %v528, 1.442695
    %v554 = vpow.pop %v553
    %v555 = vmul.f32 %v529, 1.442695
    %v556 = vpow.pop %v555
    %v557 = vmul.f32 %v530, 1.442695
    %v558 = vpow.pop %v557
    %v559 = vmul.f32 %v531, 1.442695
    %v560 = vpow.pop %v559
    %v561 = vmul.f32 %v532, 1.442695
    %v562 = vpow.pop %v561
    %v563 = vmul.f32 %v533, 1.442695
    %v564 = vpow.pop %v563
    %v565 = vmul.f32 %v534, 1.442695
    %v566 = vpow.pop %v565
    %567 = vadd.xlane.f32.xlu0 %v536
    %v568 = vpop.xlane.xlu0 %567
    %569 = vadd.xlane.f32.xlu0 %v538
    %v570 = vpop.xlane.xlu0 %569
    %571 = vadd.xlane.f32.xlu0 %v540
    %v572 = vpop.xlane.xlu0 %571
    %573 = vadd.xlane.f32.xlu0 %v542
    %v574 = vpop.xlane.xlu0 %573
    %575 = vadd.xlane.f32.xlu0 %v544
    %v576 = vpop.xlane.xlu0 %575
    %577 = vadd.xlane.f32.xlu0 %v546
    %v578 = vpop.xlane.xlu0 %577
    %579 = vadd.xlane.f32.xlu0 %v548
    %v580 = vpop.xlane.xlu0 %579
    %581 = vadd.xlane.f32.xlu0 %v550
    %v582 = vpop.xlane.xlu0 %581
    %583 = vadd.xlane.f32.xlu0 %v552
    %v584 = vpop.xlane.xlu0 %583
    %585 = vadd.xlane.f32.xlu0 %v554
    %v586 = vpop.xlane.xlu0 %585
    %587 = vadd.xlane.f32.xlu0 %v556
    %v588 = vpop.xlane.xlu0 %587
    %589 = vadd.xlane.f32.xlu0 %v558
    %v590 = vpop.xlane.xlu0 %589
    %591 = vadd.xlane.f32.xlu0 %v560
    %v592 = vpop.xlane.xlu0 %591
    %593 = vadd.xlane.f32.xlu0 %v562
    %v594 = vpop.xlane.xlu0 %593
    %595 = vadd.xlane.f32.xlu0 %v564
    %v596 = vpop.xlane.xlu0 %595
    %597 = vadd.xlane.f32.xlu0 %v566
    %v598 = vpop.xlane.xlu0 %597
    %v599 = vlog2.pop %v568
    %v600 = vmul.f32 %v599, 0.6931472
    %v601 = vlog2.pop %v570
    %v602 = vmul.f32 %v601, 0.6931472
    %v603 = vlog2.pop %v572
    %v604 = vmul.f32 %v603, 0.6931472
    %v605 = vlog2.pop %v574
    %v606 = vmul.f32 %v605, 0.6931472
    %v607 = vlog2.pop %v576
    %v608 = vmul.f32 %v607, 0.6931472
    %v609 = vlog2.pop %v578
    %v610 = vmul.f32 %v609, 0.6931472
    %v611 = vlog2.pop %v580
    %v612 = vmul.f32 %v611, 0.6931472
    %v613 = vlog2.pop %v582
    %v614 = vmul.f32 %v613, 0.6931472
    %v615 = vlog2.pop %v584
    %v616 = vmul.f32 %v615, 0.6931472
    %v617 = vlog2.pop %v586
    %v618 = vmul.f32 %v617, 0.6931472
    %v619 = vlog2.pop %v588
    %v620 = vmul.f32 %v619, 0.6931472
    %v621 = vlog2.pop %v590
    %v622 = vmul.f32 %v621, 0.6931472
    %v623 = vlog2.pop %v592
    %v624 = vmul.f32 %v623, 0.6931472
    %v625 = vlog2.pop %v594
    %v626 = vmul.f32 %v625, 0.6931472
    %v627 = vlog2.pop %v596
    %v628 = vmul.f32 %v627, 0.6931472
    %v629 = vlog2.pop %v598
    %v630 = vmul.f32 %v629, 0.6931472
    %v631 = vadd.f32 %v600, %v488
    %v632 = vadd.f32 %v602, %v490
    %v633 = vadd.f32 %v604, %v492
    %v634 = vadd.f32 %v606, %v494
    %v635 = vadd.f32 %v608, %v496
    %v636 = vadd.f32 %v610, %v498
    %v637 = vadd.f32 %v612, %v500
    %v638 = vadd.f32 %v614, %v502
    %v639 = vadd.f32 %v616, %v504
    %v640 = vadd.f32 %v618, %v506
    %v641 = vadd.f32 %v620, %v508
    %v642 = vadd.f32 %v622, %v510
    %v643 = vadd.f32 %v624, %v512
    %v644 = vadd.f32 %v626, %v514
    %v645 = vadd.f32 %v628, %v516
    %v646 = vadd.f32 %v630, %v518
    %v647 = vsub.f32 %v448, %v631
    %v648 = vsub.f32 %v450, %v632
    %v649 = vsub.f32 %v453, %v633
    %v650 = vsub.f32 %v455, %v634
    %v651 = vsub.f32 %v458, %v635
    %v652 = vsub.f32 %v460, %v636
    %v653 = vsub.f32 %v463, %v637
    %v654 = vsub.f32 %v465, %v638
    %v655 = vsub.f32 %v468, %v639
    %v656 = vsub.f32 %v470, %v640
    %v657 = vsub.f32 %v473, %v641
    %v658 = vsub.f32 %v475, %v642
    %v659 = vsub.f32 %v478, %v643
    %v660 = vsub.f32 %v480, %v644
    %v661 = vsub.f32 %v483, %v645
    %v662 = vsub.f32 %v485, %v646
    %663 = vst [vmem:[#allocation5] sm:$0xff] %v647
    %664 = vst [vmem:[#allocation5 + $0x8] sm:$0xff] %v648
    %665 = vst [vmem:[#allocation5 + $0x10] sm:$0xff] %v649
    %666 = vst [vmem:[#allocation5 + $0x18] sm:$0xff] %v650
    %667 = vst [vmem:[#allocation5 + $0x20] sm:$0xff] %v651
    %668 = vst [vmem:[#allocation5 + $0x28] sm:$0xff] %v652
    %669 = vst [vmem:[#allocation5 + $0x30] sm:$0xff] %v653
    %670 = vst [vmem:[#allocation5 + $0x38] sm:$0xff] %v654
    %671 = vst [vmem:[#allocation5 + $0x40] sm:$0xff] %v655
    %672 = vst [vmem:[#allocation5 + $0x48] sm:$0xff] %v656
    %673 = vst [vmem:[#allocation5 + $0x50] sm:$0xff] %v657
    %674 = vst [vmem:[#allocation5 + $0x58] sm:$0xff] %v658
    %675 = vst [vmem:[#allocation5 + $0x60] sm:$0xff] %v659
    %676 = vst [vmem:[#allocation5 + $0x68] sm:$0xff] %v660
    %677 = vst [vmem:[#allocation5 + $0x70] sm:$0xff] %v661
    %678 = vst [vmem:[#allocation5 + $0x78] sm:$0xff] %v662
    // Predicated region
    $region30: #{gcn_net_forward.1} parent=1 // pred_check
      _
    $region31: #{gcn_net_forward.1} parent=1 // pred_check_branch
      %680 = sbr.rel (0) target = $region33
    $region32: #{gcn_net_forward.1} parent=1 // pred_region
      %682 = vsyncadd [#allocation4], 0
      %s683 = sshll.u32 [#allocation5], 4
      %s684 = int_to_ptr.vmem [resolvable:$true] %s683
      %s685 = sshll.u32 %s6, 4
      %s686 = int_to_ptr.hbm [resolvable:$true] %s685
      %691 = dma.vmem_to_hbm [thread:$0]  %s684, 2048, %s686, [#allocation4], 128, 128, 8
    $region33: #{gcn_net_forward.1} parent=1 // pred_fallthru
      _
    // Predicated region
    $region34: #{gcn_net_forward.1} parent=1 // pred_check
      _
    $region35: #{gcn_net_forward.1} parent=1 // pred_check_branch
      %693 = sbr.rel (0) target = $region37
    $region36: #{gcn_net_forward.1} parent=1 // pred_region
      %695 = dma.done [#allocation4], 2048
    $region37: #{gcn_net_forward.1} parent=1 // pred_fallthru
      _
    %696 = vsyncpa [#allocation3], 1
    %697 = vsyncpa [#allocation4], 1

</llo_original>
